<compile_context>
chip_gen: v5e
topology: v5e:2x2
jax: 0.10.0
libtpu: 0.0.40
codegen_flags: <defaults>
</compile_context>

<pallas_src>
import jax
import jax.numpy as jnp
from jax.experimental import pallas as pl
from jax.experimental.pallas import tpu as pltpu

_EPS = 1e-5          # nn.InstanceNorm2d default eps
_NEG_SLOPE = 0.2     # LeakyReLU slope


def _skip_fusion_kernel(xd_ref, xe_ref, wd_ref, we_ref, o_ref):
    # xd_ref: (Nb, Cd, HW)   xe_ref: (Nb, Ce, HW)
    # wd_ref: (Cout, Cd)     we_ref: (Cout, Ce)
    # o_ref : (Nb, Cout, HW)
    wd = wd_ref[...]
    we = we_ref[...]
    nb = xd_ref.shape[0]

    # Static unroll over the (small, <= 8) per-step sample batch; weights stay
    # resident in vregs/VMEM across the unrolled iterations.
    for n in range(nb):
        xd = xd_ref[n]                      # (Cd, HW)
        xe = xe_ref[n]                      # (Ce, HW)

        # 1x1 conv == channel matmul, split across the two un-concatenated
        # inputs, accumulated in f32 on the MXU.
        y = jnp.dot(wd, xd, preferred_element_type=jnp.float32)
        y = y + jnp.dot(we, xe, preferred_element_type=jnp.float32)   # (Cout, HW)

        # InstanceNorm2d stats (affine=False, biased variance) over the spatial
        # (lane) axis.  Two-pass centered variance kept for numerical safety;
        # conv bias intentionally omitted -- it cancels under mean removal.
        mean = jnp.mean(y, axis=1, keepdims=True)                      # (Cout, 1)
        var = jnp.mean(jnp.square(y - mean), axis=1, keepdims=True)    # (Cout, 1)

        # Single fused elementwise pass: normalize + LeakyReLU + store.
        scale = jax.lax.rsqrt(var + _EPS)                              # (Cout, 1)
        shift = -mean * scale                                          # (Cout, 1)
        t = y * scale + shift
        o_ref[n] = jnp.where(t >= 0.0, t, _NEG_SLOPE * t).astype(o_ref.dtype)


def _vmem_capacity_bytes():
    try:
        return int(pltpu.get_tpu_info().vmem_capacity_bytes)
    except Exception:
        return 128 << 20   # conservative v5e/v6e assumption


def _pick_samples_per_step(n, per_sample_bytes, target_bytes=8 << 20, max_nb=8):
    """Largest divisor of n (<= max_nb) whose block stays under target_bytes."""
    nb = 1
    for cand in range(1, min(n, max_nb) + 1):
        if n % cand == 0 and cand * per_sample_bytes <= target_bytes:
            nb = cand
    return nb


def skip_fusion_pallas(xd, xe, wd, we):
    """xd: (N, Cd, HW), xe: (N, Ce, HW), wd: (Cout, Cd), we: (Cout, Ce)."""
    N, Cd, HW = xd.shape
    _, Ce, _ = xe.shape
    Cout = wd.shape[0]
    in_isz = jnp.dtype(xd.dtype).itemsize
    w_isz = jnp.dtype(wd.dtype).itemsize

    # --- choose how many samples to process per grid step -------------------
    per_sample_bytes = (HW * (Cd + Ce + Cout) * in_isz      # in + out blocks
                        + 3 * Cout * HW * 4)                # f32 compute temps
    Nb = _pick_samples_per_step(N, per_sample_bytes)
    grid = (N // Nb,)

    # --- VMEM budget ---------------------------------------------------------
    in_block = Nb * HW * (Cd + Ce) * in_isz
    out_block = Nb * HW * Cout * in_isz
    w_block = (Cd + Ce) * Cout * w_isz
    f32_temps = 3 * Nb * Cout * HW * 4
    needed = 2 * (in_block + out_block + w_block) + f32_temps + (4 << 20)
    cap = int(0.75 * _vmem_capacity_bytes())      # ~48 MiB v7x, ~96 MiB v5e/v6e
    vmem_limit = int(min(max(needed, 16 << 20), cap))

    cost = pl.CostEstimate(
        flops=2 * N * HW * (Cd + Ce) * Cout,
        transcendentals=0,
        bytes_accessed=in_isz * N * HW * (Cd + Ce + Cout)
                       + w_isz * (Cd + Ce) * Cout,
    )

    return pl.pallas_call(
        _skip_fusion_kernel,
        out_shape=jax.ShapeDtypeStruct((N, Cout, HW), xd.dtype),
        grid_spec=pltpu.PrefetchScalarGridSpec(
            num_scalar_prefetch=0,
            grid=grid,
            in_specs=[
                pl.BlockSpec((Nb, Cd, HW), lambda n: (n, 0, 0)),
                pl.BlockSpec((Nb, Ce, HW), lambda n: (n, 0, 0)),
                pl.BlockSpec((Cout, Cd), lambda n: (0, 0)),   # invariant
                pl.BlockSpec((Cout, Ce), lambda n: (0, 0)),   # invariant
            ],
            out_specs=pl.BlockSpec((Nb, Cout, HW), lambda n: (n, 0, 0)),
        ),
        compiler_params=pltpu.CompilerParams(
            dimension_semantics=("parallel",),
            vmem_limit_bytes=vmem_limit),
        cost_estimate=cost,
    )(xd, xe, wd, we)


def skip_fusion_forward(decoder_feat, encoder_feat, weight, bias=None):
    """Forward matching SkipFusion.forward.

    decoder_feat: (N, Cd, H, W)   NCHW
    encoder_feat: (N, Ce, He, We) NCHW
    weight:       (Cout, Cd + Ce) -- 1x1 conv weight with k-dims squeezed
    bias:         (Cout,) or None -- accepted but unused: exactly cancelled by
                  the affine-free InstanceNorm mean subtraction.
    returns:      (N, Cout, H, W) NCHW
    """
    del bias  # cancelled by InstanceNorm2d (affine=False)
    N, Cd, H, W = decoder_feat.shape
    Ce = encoder_feat.shape[1]
    Cout = weight.shape[0]

    if encoder_feat.shape[2:] != (H, W):
        # bilinear, half-pixel centers == align_corners=False; antialias=False
        # matches torch F.interpolate for both up- and down-sampling.
        encoder_feat = jax.image.resize(
            encoder_feat, (N, Ce, H, W), method="bilinear", antialias=False)

    # NCHW -> (N, C, H*W) is a free reshape in the (C, HW) kernel layout.
    xd = decoder_feat.reshape(N, Cd, H * W)
    xe = encoder_feat.reshape(N, Ce, H * W)
    wd = weight[:, :Cd]      # (Cout, Cd)
    we = weight[:, Cd:]      # (Cout, Ce)

    out = skip_fusion_pallas(xd, xe, wd, we)     # (N, Cout, HW)
    return out.reshape(N, Cout, H, W)


if __name__ == "__main__":
    key = jax.random.PRNGKey(0)
    k1, k2, k3, k4 = jax.random.split(key, 4)

    # SkipFusion(decoder_channels=4, encoder_channels=4, out_channels=8)
    N, Cd, Ce, Cout, H, W = 2, 4, 4, 8, 16, 16
    Cin = Cd + Ce

    decoder_feat = jax.random.normal(k1, (N, Cd, H, W), dtype=jnp.float32)
    encoder_feat = jax.random.normal(k2, (N, Ce, H, W), dtype=jnp.float32)

    # Deterministic synthetic params (Conv2d(Cin, Cout, 1): w (Cout, Cin), b (Cout,))
    bound = 1.0 / (Cin ** 0.5)
    w_conv = jax.random.uniform(k3, (Cout, Cin), minval=-bound, maxval=bound,
                                dtype=jnp.float32)
    b_conv = jax.random.uniform(k4, (Cout,), minval=-bound, maxval=bound,
                                dtype=jnp.float32)

    out = skip_fusion_forward(decoder_feat, encoder_feat, w_conv, b_conv)
    out = jax.block_until_ready(out)

    # Pure-JAX reference (includes the conv bias to prove it cancels).
    concat = jnp.concatenate([decoder_feat, encoder_feat], axis=1)
    y_ref = jnp.einsum("nchw,oc->nohw", concat, w_conv,
                       precision=jax.lax.Precision.HIGHEST)
    y_ref = y_ref + b_conv[None, :, None, None]
    mean = y_ref.mean(axis=(2, 3), keepdims=True)
    var = ((y_ref - mean) ** 2).mean(axis=(2, 3), keepdims=True)
    y_ref = (y_ref - mean) / jnp.sqrt(var + _EPS)
    y_ref = jnp.where(y_ref >= 0, y_ref, _NEG_SLOPE * y_ref)

    assert out.shape == (N, Cout, H, W)
    assert jnp.allclose(out, y_ref, atol=2e-4, rtol=2e-4), "mismatch vs reference"

    print("KERNEL_OK")
</pallas_src>

<mosaic_0001>
module attributes {stable_mosaic.version = 11 : i64} {
  func.func @_skip_fusion_kernel(%arg0: i32, %arg1: memref<2x4x256xf32, #tpu.memory_space<vmem>>, %arg2: memref<2x4x256xf32, #tpu.memory_space<vmem>>, %arg3: memref<8x4xf32, #tpu.memory_space<vmem>>, %arg4: memref<8x4xf32, #tpu.memory_space<vmem>>, %arg5: memref<2x8x256xf32, #tpu.memory_space<vmem>>) attributes {dimension_semantics = [#tpu.dimension_semantics<parallel>], iteration_bounds = array<i64: 1>, scalar_prefetch = 0 : i64, scratch_operands = 0 : i64, tpu.core_type = #tpu.core_type<tc>, window_params = [{transform_indices = @transform_0, window_bounds = array<i64: 2, 4, 256>}, {transform_indices = @transform_1, window_bounds = array<i64: 2, 4, 256>}, {pipeline_mode = #tpu.pipeline_mode<synchronous>, transform_indices = @transform_2, window_bounds = array<i64: 8, 4>}, {pipeline_mode = #tpu.pipeline_mode<synchronous>, transform_indices = @transform_3, window_bounds = array<i64: 8, 4>}, {transform_indices = @transform_4, window_bounds = array<i64: 2, 8, 256>}]} {
    %c0 = arith.constant 0 : index
    %c0_0 = arith.constant 0 : index
    %0 = vector.load %arg3[%c0, %c0_0] : memref<8x4xf32, #tpu.memory_space<vmem>>, vector<8x4xf32>
    %c0_1 = arith.constant 0 : index
    %c0_2 = arith.constant 0 : index
    %1 = vector.load %arg4[%c0_1, %c0_2] : memref<8x4xf32, #tpu.memory_space<vmem>>, vector<8x4xf32>
    %c0_3 = arith.constant 0 : index
    %c0_4 = arith.constant 0 : index
    %c0_5 = arith.constant 0 : index
    %2 = vector.load %arg1[%c0_3, %c0_4, %c0_5] : memref<2x4x256xf32, #tpu.memory_space<vmem>>, vector<1x4x256xf32>
    %3 = vector.shape_cast %2 : vector<1x4x256xf32> to vector<4x256xf32>
    %c0_6 = arith.constant 0 : index
    %c0_7 = arith.constant 0 : index
    %c0_8 = arith.constant 0 : index
    %4 = vector.load %arg2[%c0_6, %c0_7, %c0_8] : memref<2x4x256xf32, #tpu.memory_space<vmem>>, vector<1x4x256xf32>
    %5 = vector.shape_cast %4 : vector<1x4x256xf32> to vector<4x256xf32>
    %cst = arith.constant dense<0.000000e+00> : vector<8x256xf32>
    %6 = tpu.matmul %0, %3, %cst {dimension_numbers = #tpu.dot_dimension_numbers<[1], [0], [0], [1], [0, 0, 1, 1], [], []>} : vector<8x4xf32>, vector<4x256xf32>, vector<8x256xf32> -> vector<8x256xf32>
    %cst_9 = arith.constant dense<0.000000e+00> : vector<8x256xf32>
    %7 = tpu.matmul %1, %5, %cst_9 {dimension_numbers = #tpu.dot_dimension_numbers<[1], [0], [0], [1], [0, 0, 1, 1], [], []>} : vector<8x4xf32>, vector<4x256xf32>, vector<8x256xf32> -> vector<8x256xf32>
    %8 = arith.addf %6, %7 : vector<8x256xf32>
    %cst_10 = arith.constant dense<0.000000e+00> : vector<8xf32>
    %9 = vector.multi_reduction <add>, %8, %cst_10 [1] : vector<8x256xf32> to vector<8xf32>
    %10 = vector.shape_cast %9 : vector<8xf32> to vector<8x1xf32>
    %cst_11 = arith.constant 2.560000e+02 : f32
    %11 = vector.broadcast %cst_11 : f32 to vector<8x1xf32>
    %12 = arith.divf %10, %11 : vector<8x1xf32>
    %13 = vector.broadcast %12 : vector<8x1xf32> to vector<8x256xf32>
    %14 = arith.subf %8, %13 : vector<8x256xf32>
    %15 = arith.mulf %14, %14 : vector<8x256xf32>
    %cst_12 = arith.constant dense<0.000000e+00> : vector<8xf32>
    %16 = vector.multi_reduction <add>, %15, %cst_12 [1] : vector<8x256xf32> to vector<8xf32>
    %17 = vector.shape_cast %16 : vector<8xf32> to vector<8x1xf32>
    %cst_13 = arith.constant 2.560000e+02 : f32
    %18 = vector.broadcast %cst_13 : f32 to vector<8x1xf32>
    %19 = arith.divf %17, %18 : vector<8x1xf32>
    %cst_14 = arith.constant 9.99999974E-6 : f32
    %20 = vector.broadcast %cst_14 : f32 to vector<8x1xf32>
    %21 = arith.addf %19, %20 : vector<8x1xf32>
    %22 = math.rsqrt %21 : vector<8x1xf32>
    %cst_15 = arith.constant 0.000000e+00 : f32
    %23 = vector.broadcast %cst_15 : f32 to vector<8x1xf32>
    %24 = arith.subf %23, %12 : vector<8x1xf32>
    %25 = arith.mulf %24, %22 : vector<8x1xf32>
    %26 = vector.broadcast %22 : vector<8x1xf32> to vector<8x256xf32>
    %27 = arith.mulf %8, %26 : vector<8x256xf32>
    %28 = vector.broadcast %25 : vector<8x1xf32> to vector<8x256xf32>
    %29 = arith.addf %27, %28 : vector<8x256xf32>
    %cst_16 = arith.constant 0.000000e+00 : f32
    %30 = vector.broadcast %cst_16 : f32 to vector<8x256xf32>
    %31 = arith.cmpf oge, %29, %30 : vector<8x256xf32>
    %cst_17 = arith.constant 2.000000e-01 : f32
    %32 = vector.broadcast %cst_17 : f32 to vector<8x256xf32>
    %33 = arith.mulf %32, %29 : vector<8x256xf32>
    %34 = arith.select %31, %29, %33 : vector<8x256xi1>, vector<8x256xf32>
    %c0_18 = arith.constant 0 : index
    %c0_19 = arith.constant 0 : index
    %c0_20 = arith.constant 0 : index
    %35 = vector.load %arg5[%c0_18, %c0_19, %c0_20] : memref<2x8x256xf32, #tpu.memory_space<vmem>>, vector<1x8x256xf32>
    %36 = vector.shape_cast %35 : vector<1x8x256xf32> to vector<8x256xf32>
    %37 = vector.shape_cast %34 : vector<8x256xf32> to vector<1x8x256xf32>
    tpu.vector_store %arg5[%c0_18, %c0_19, %c0_20], %37 {strides = array<i32>} : memref<2x8x256xf32, #tpu.memory_space<vmem>>, vector<1x8x256xf32>,
    %c1 = arith.constant 1 : index
    %c0_21 = arith.constant 0 : index
    %c0_22 = arith.constant 0 : index
    %38 = vector.load %arg1[%c1, %c0_21, %c0_22] : memref<2x4x256xf32, #tpu.memory_space<vmem>>, vector<1x4x256xf32>
    %39 = vector.shape_cast %38 : vector<1x4x256xf32> to vector<4x256xf32>
    %c1_23 = arith.constant 1 : index
    %c0_24 = arith.constant 0 : index
    %c0_25 = arith.constant 0 : index
    %40 = vector.load %arg2[%c1_23, %c0_24, %c0_25] : memref<2x4x256xf32, #tpu.memory_space<vmem>>, vector<1x4x256xf32>
    %41 = vector.shape_cast %40 : vector<1x4x256xf32> to vector<4x256xf32>
    %cst_26 = arith.constant dense<0.000000e+00> : vector<8x256xf32>
    %42 = tpu.matmul %0, %39, %cst_26 {dimension_numbers = #tpu.dot_dimension_numbers<[1], [0], [0], [1], [0, 0, 1, 1], [], []>} : vector<8x4xf32>, vector<4x256xf32>, vector<8x256xf32> -> vector<8x256xf32>
    %cst_27 = arith.constant dense<0.000000e+00> : vector<8x256xf32>
    %43 = tpu.matmul %1, %41, %cst_27 {dimension_numbers = #tpu.dot_dimension_numbers<[1], [0], [0], [1], [0, 0, 1, 1], [], []>} : vector<8x4xf32>, vector<4x256xf32>, vector<8x256xf32> -> vector<8x256xf32>
    %44 = arith.addf %42, %43 : vector<8x256xf32>
    %cst_28 = arith.constant dense<0.000000e+00> : vector<8xf32>
    %45 = vector.multi_reduction <add>, %44, %cst_28 [1] : vector<8x256xf32> to vector<8xf32>
    %46 = vector.shape_cast %45 : vector<8xf32> to vector<8x1xf32>
    %cst_29 = arith.constant 2.560000e+02 : f32
    %47 = vector.broadcast %cst_29 : f32 to vector<8x1xf32>
    %48 = arith.divf %46, %47 : vector<8x1xf32>
    %49 = vector.broadcast %48 : vector<8x1xf32> to vector<8x256xf32>
    %50 = arith.subf %44, %49 : vector<8x256xf32>
    %51 = arith.mulf %50, %50 : vector<8x256xf32>
    %cst_30 = arith.constant dense<0.000000e+00> : vector<8xf32>
    %52 = vector.multi_reduction <add>, %51, %cst_30 [1] : vector<8x256xf32> to vector<8xf32>
    %53 = vector.shape_cast %52 : vector<8xf32> to vector<8x1xf32>
    %cst_31 = arith.constant 2.560000e+02 : f32
    %54 = vector.broadcast %cst_31 : f32 to vector<8x1xf32>
    %55 = arith.divf %53, %54 : vector<8x1xf32>
    %cst_32 = arith.constant 9.99999974E-6 : f32
    %56 = vector.broadcast %cst_32 : f32 to vector<8x1xf32>
    %57 = arith.addf %55, %56 : vector<8x1xf32>
    %58 = math.rsqrt %57 : vector<8x1xf32>
    %cst_33 = arith.constant 0.000000e+00 : f32
    %59 = vector.broadcast %cst_33 : f32 to vector<8x1xf32>
    %60 = arith.subf %59, %48 : vector<8x1xf32>
    %61 = arith.mulf %60, %58 : vector<8x1xf32>
    %62 = vector.broadcast %58 : vector<8x1xf32> to vector<8x256xf32>
    %63 = arith.mulf %44, %62 : vector<8x256xf32>
    %64 = vector.broadcast %61 : vector<8x1xf32> to vector<8x256xf32>
    %65 = arith.addf %63, %64 : vector<8x256xf32>
    %cst_34 = arith.constant 0.000000e+00 : f32
    %66 = vector.broadcast %cst_34 : f32 to vector<8x256xf32>
    %67 = arith.cmpf oge, %65, %66 : vector<8x256xf32>
    %cst_35 = arith.constant 2.000000e-01 : f32
    %68 = vector.broadcast %cst_35 : f32 to vector<8x256xf32>
    %69 = arith.mulf %68, %65 : vector<8x256xf32>
    %70 = arith.select %67, %65, %69 : vector<8x256xi1>, vector<8x256xf32>
    %c1_36 = arith.constant 1 : index
    %c0_37 = arith.constant 0 : index
    %c0_38 = arith.constant 0 : index
    %71 = vector.load %arg5[%c1_36, %c0_37, %c0_38] : memref<2x8x256xf32, #tpu.memory_space<vmem>>, vector<1x8x256xf32>
    %72 = vector.shape_cast %71 : vector<1x8x256xf32> to vector<8x256xf32>
    %73 = vector.shape_cast %70 : vector<8x256xf32> to vector<1x8x256xf32>
    tpu.vector_store %arg5[%c1_36, %c0_37, %c0_38], %73 {strides = array<i32>} : memref<2x8x256xf32, #tpu.memory_space<vmem>>, vector<1x8x256xf32>,
    return
  }
  func.func @transform_0(%arg0: i32) -> (i32, i32, i32) {
    %c0_i32 = arith.constant 0 : i32
    %c0_i32_0 = arith.constant 0 : i32
    %c0_i32_1 = arith.constant 0 : i32
    return %arg0, %c0_i32, %c0_i32_0 : i32, i32, i32
  }
  func.func @transform_1(%arg0: i32) -> (i32, i32, i32) {
    %c0_i32 = arith.constant 0 : i32
    %c0_i32_0 = arith.constant 0 : i32
    %c0_i32_1 = arith.constant 0 : i32
    return %arg0, %c0_i32, %c0_i32_0 : i32, i32, i32
  }
  func.func @transform_2(%arg0: i32) -> (i32, i32) {
    %c0_i32 = arith.constant 0 : i32
    %c0_i32_0 = arith.constant 0 : i32
    %c0_i32_1 = arith.constant 0 : i32
    return %c0_i32, %c0_i32_0 : i32, i32
  }
  func.func @transform_3(%arg0: i32) -> (i32, i32) {
    %c0_i32 = arith.constant 0 : i32
    %c0_i32_0 = arith.constant 0 : i32
    %c0_i32_1 = arith.constant 0 : i32
    return %c0_i32, %c0_i32_0 : i32, i32
  }
  func.func @transform_4(%arg0: i32) -> (i32, i32, i32) {
    %c0_i32 = arith.constant 0 : i32
    %c0_i32_0 = arith.constant 0 : i32
    %c0_i32_1 = arith.constant 0 : i32
    return %arg0, %c0_i32, %c0_i32_0 : i32, i32, i32
  }
}

</mosaic_0001>

<llo_original>
// kernel: tpu_custom_call.1
$region0: #{tpu_custom_call.1}
  #allocation0 [shape = 'u32[]', space=smem, size = 0x4, offset = 0x4, fixed_abs, tag = 'smem constant byte address 0x4 - core index']
  #allocation1 [shape = 'u32[72,128]{1,0:T(1,128)}', space=vmem, size = 0x9000, scoped, tag = 'internal scratch']
  %s0 = inlined_call_operand.vmem [shape: f32[2,4,256], index: 0, kind: input, shape index: {}]
  %s1 = inlined_call_operand.hbm [shape: f32[2,4,256], index: 1, kind: input, shape index: {}]
  %s2 = inlined_call_operand.vmem [shape: f32[8,4], index: 2, kind: input, shape index: {}]
  %s3 = inlined_call_operand.vmem [shape: f32[8,4], index: 3, kind: input, shape index: {}]
  %s4 = inlined_call_operand.hbm [shape: f32[2,8,256], index: 4, kind: output, shape index: {}]
  %s5 = sld [smem:[#allocation0]]
  $region30: #{tpu_custom_call.1} parent=0
    _
  %s7 = ssub.s32 1, %s5
  %s8 = scalar_select 0, %s7, %s5
  $region1: #{tpu_custom_call.1} parent=0
    #allocation2 [shape = 'u8[8192]{0}', space=vmem, size = 0x2000, scoped, tag = 'input window, operand 1, single buffered']
    #allocation3 [shape = 's32[1]{0}', space=sflag, size = 0x4, scoped, tag = 'scoped memory for tpu_custom_call.1']
    #allocation4 [shape = 's32[1]{0}', space=sflag, size = 0x4, scoped, tag = 'scoped memory for tpu_custom_call.1']
    #allocation5 [shape = 'u8[16384]{0}', space=vmem, size = 0x4000, scoped, tag = 'output window, operand 0, single buffered']
    %9 = vsyncpa [#allocation3], 0
    %10 = vsyncpa [#allocation4], 0
    // Predicated region
    $region2: #{tpu_custom_call.1} parent=1 // pred_check
      _
    $region3: #{tpu_custom_call.1} parent=1 // pred_check_branch
      %12 = sbr.rel (0) target = $region5
    $region4: #{tpu_custom_call.1} parent=1 // pred_region
      _
    $region5: #{tpu_custom_call.1} parent=1 // pred_fallthru
      _
    // Predicated region
    $region6: #{tpu_custom_call.1} parent=1 // pred_check
      _
    $region7: #{tpu_custom_call.1} parent=1 // pred_check_branch
      %14 = sbr.rel (0) target = $region9
    $region8: #{tpu_custom_call.1} parent=1 // pred_region
      %16 = vsyncadd [#allocation3], 0
      %s17 = sshll.u32 %s1, 4
      %s18 = int_to_ptr.hbm [resolvable:$true] %s17
      %s19 = sshll.u32 [#allocation2], 4
      %s20 = int_to_ptr.vmem [resolvable:$true] %s19
      %25 = dma.hbm_to_vmem [thread:$0]  %s18, 256, %s20, [#allocation3], 128, 128, 8
    $region9: #{tpu_custom_call.1} parent=1 // pred_fallthru
      _
    // Predicated region
    $region10: #{tpu_custom_call.1} parent=1 // pred_check
      _
    $region11: #{tpu_custom_call.1} parent=1 // pred_check_branch
      %27 = sbr.rel (0) target = $region13
    $region12: #{tpu_custom_call.1} parent=1 // pred_region
      _
    $region13: #{tpu_custom_call.1} parent=1 // pred_fallthru
      _
    // Predicated region
    $region14: #{tpu_custom_call.1} parent=1 // pred_check
      _
    $region15: #{tpu_custom_call.1} parent=1 // pred_check_branch
      %29 = sbr.rel (0) target = $region17
    $region16: #{tpu_custom_call.1} parent=1 // pred_region
      _
    $region17: #{tpu_custom_call.1} parent=1 // pred_fallthru
      _
    // Predicated region
    $region18: #{tpu_custom_call.1} parent=1 // pred_check
      _
    $region19: #{tpu_custom_call.1} parent=1 // pred_check_branch
      %31 = sbr.rel (0) target = $region21
    $region20: #{tpu_custom_call.1} parent=1 // pred_region
      %33 = dma.done [#allocation3], 256
    $region21: #{tpu_custom_call.1} parent=1 // pred_fallthru
      _
    %v34 = vld [vmem:[%s2] sm:$0xff]
    %v35 = vld [vmem:[%s3] sm:$0xff]
    %v36 = vld [vmem:[%s0] sm:$0xff]
    %v37 = vld [vmem:[#allocation2] sm:$0xff]
    %39 = vst [vmem:[#allocation1] ss:$2 sm:$0xff] %v37
    %v40 = vld.sshfl [vmem:[#allocation1] sm:$0xff pattern:$0x75316420]
    %v41 = vld.sshfl [vmem:[#allocation1 + $0x8] sm:$0xff pattern:$0x75316420]
    %vm42 = vcmask 31744
    %v44 = vsel %vm42, %v35, 0
    %vm46 = vcmask 1043456
    %v47 = vsel %vm46, %v40, 0
    %v49 = vsel %vm46, %v41, 0
    %51 = vmatpush.msra.mxu0 0.0
    %52 = vmatpush.msra.mxu0 0.0
    %53 = vmatpush.msra.mxu0 0.0
    %54 = vmatpush.msra.mxu0 0.0
    %55 = vmatpush.msra.mxu0 0.0
    %56 = vmatpush.msra.mxu0 0.0
    %57 = vmatpush.msra.mxu0 0.0
    %58 = vmatpush.msra.mxu0 0.0
    %59 = vmatpush.msra.mxu0 0.0
    %60 = vmatpush.msra.mxu0 0.0
    %61 = vmatpush.msra.mxu0 0.0
    %62 = vmatpush.msra.mxu0 0.0
    %63 = vmatpush.msra.mxu0 0.0
    %64 = vmatpush.msra.mxu0 0.0
    %65 = vmatpush.msra.mxu0 0.0
    %66 = vmatpush.msra.mxu0 %v47
    %67 = vmatmul.f32.gmra.mxu0 %v44
    %v68 = vpop.f32.mrf.mxu0
    %v69 = vadd.f32 0.0, %v68
    %70 = vdwg.mxu0
    %71 = vmatpush.msra.mxu0 0.0
    %72 = vmatpush.msra.mxu0 0.0
    %73 = vmatpush.msra.mxu0 0.0
    %74 = vmatpush.msra.mxu0 0.0
    %75 = vmatpush.msra.mxu0 0.0
    %76 = vmatpush.msra.mxu0 0.0
    %77 = vmatpush.msra.mxu0 0.0
    %78 = vmatpush.msra.mxu0 0.0
    %79 = vmatpush.msra.mxu0 0.0
    %80 = vmatpush.msra.mxu0 0.0
    %81 = vmatpush.msra.mxu0 0.0
    %82 = vmatpush.msra.mxu0 0.0
    %83 = vmatpush.msra.mxu0 0.0
    %84 = vmatpush.msra.mxu0 0.0
    %85 = vmatpush.msra.mxu0 0.0
    %86 = vmatpush.msra.mxu0 %v49
    %87 = vmatmul.f32.gmra.mxu0 %v44
    %v88 = vpop.f32.mrf.mxu0
    %v89 = vadd.f32 0.0, %v88
    %90 = vdwg.mxu0
    %92 = vst [vmem:[#allocation1] ss:$2 sm:$0xff] %v36
    %v93 = vld.sshfl [vmem:[#allocation1] sm:$0xff pattern:$0x75316420]
    %v94 = vld.sshfl [vmem:[#allocation1 + $0x8] sm:$0xff pattern:$0x75316420]
    %v96 = vsel %vm42, %v34, 0
    %v98 = vsel %vm46, %v93, 0
    %v100 = vsel %vm46, %v94, 0
    %102 = vmatpush.msra.mxu0 0.0
    %103 = vmatpush.msra.mxu0 0.0
    %104 = vmatpush.msra.mxu0 0.0
    %105 = vmatpush.msra.mxu0 0.0
    %106 = vmatpush.msra.mxu0 0.0
    %107 = vmatpush.msra.mxu0 0.0
    %108 = vmatpush.msra.mxu0 0.0
    %109 = vmatpush.msra.mxu0 0.0
    %110 = vmatpush.msra.mxu0 0.0
    %111 = vmatpush.msra.mxu0 0.0
    %112 = vmatpush.msra.mxu0 0.0
    %113 = vmatpush.msra.mxu0 0.0
    %114 = vmatpush.msra.mxu0 0.0
    %115 = vmatpush.msra.mxu0 0.0
    %116 = vmatpush.msra.mxu0 0.0
    %117 = vmatpush.msra.mxu0 %v98
    %118 = vmatmul.f32.gmra.mxu0 %v96
    %v119 = vpop.f32.mrf.mxu0
    %v120 = vadd.f32 %v69, %v119
    %121 = vdwg.mxu0
    %122 = vmatpush.msra.mxu0 0.0
    %123 = vmatpush.msra.mxu0 0.0
    %124 = vmatpush.msra.mxu0 0.0
    %125 = vmatpush.msra.mxu0 0.0
    %126 = vmatpush.msra.mxu0 0.0
    %127 = vmatpush.msra.mxu0 0.0
    %128 = vmatpush.msra.mxu0 0.0
    %129 = vmatpush.msra.mxu0 0.0
    %130 = vmatpush.msra.mxu0 0.0
    %131 = vmatpush.msra.mxu0 0.0
    %132 = vmatpush.msra.mxu0 0.0
    %133 = vmatpush.msra.mxu0 0.0
    %134 = vmatpush.msra.mxu0 0.0
    %135 = vmatpush.msra.mxu0 0.0
    %136 = vmatpush.msra.mxu0 0.0
    %137 = vmatpush.msra.mxu0 %v100
    %138 = vmatmul.f32.gmra.mxu0 %v96
    %v139 = vpop.f32.mrf.mxu0
    %v140 = vadd.f32 %v89, %v139
    %141 = vdwg.mxu0
    %v142 = vadd.f32 %v120, %v140
    %143 = vadd.xlane.f32.xlu0 %v142
    %v144 = vpop.xlane.xlu0 %143
    %v145 = vrcp.pop 256.0
    %v146 = vmul.f32 256.0, %v145
    %v147 = vsub.f32 1.0, %v146
    %v148 = vmul.f32 %v145, %v147
    %v149 = vadd.f32 %v145, %v148
    %vm150 = vweird.f32 %v145
    %v151 = vsel %vm150, %v145, %v149
    %v152 = vmul.f32 %v144, %v151
    %v153 = vsub.f32 %v120, %v152
    %v154 = vsub.f32 %v140, %v152
    %v155 = vmul.f32 %v153, %v153
    %v156 = vmul.f32 %v154, %v154
    %v157 = vadd.f32 %v155, %v156
    %158 = vadd.xlane.f32.xlu0 %v157
    %v159 = vpop.xlane.xlu0 %158
    %v160 = vmul.f32 %v159, %v151
    %v161 = vadd.f32 %v160, 1e-05
    %v162 = vrsqrt.pop %v161
    %v163 = vmul.f32 %v162, %v161
    %v164 = vmul.f32 %v163, %v162
    %v165 = vmul.f32 0.5, %v164
    %v166 = vsub.f32 1.5, %v165
    %v167 = vmul.f32 %v162, %v166
    %vm168 = vweird.f32 %v161
    %vm169 = vweird.f32 %v162
    %vm170 = vmor %vm168, %vm169
    %v171 = vsel %vm170, %v162, %v167
    %v172 = vsub.f32 0.0, %v152
    %v173 = vmul.f32 %v172, %v171
    %v174 = vmul.f32 %v120, %v171
    %v175 = vmul.f32 %v140, %v171
    %v176 = vadd.f32 %v174, %v173
    %v177 = vadd.f32 %v175, %v173
    %vm178 = vcmp.ge.f32.partialorder %v176, 0.0
    %vm179 = vcmp.ge.f32.partialorder %v177, 0.0
    %v180 = vmul.f32 %v176, 0.2
    %v181 = vmul.f32 %v177, 0.2
    %v182 = vsel %vm178, %v176, %v180
    %v183 = vsel %vm179, %v177, %v181
    %184 = vst [vmem:[#allocation5] sm:$0xff] %v182
    %185 = vst [vmem:[#allocation5 + $0x8] sm:$0xff] %v183
    %s186 = scalar_lea.vmem %s0, 8
    %v187 = vld [vmem:[%s186] sm:$0xff]
    %s188 = scalar_lea.vmem [#allocation2], 8
    %v189 = vld [vmem:[%s188] sm:$0xff]
    %191 = vst [vmem:[#allocation1] ss:$2 sm:$0xff] %v189
    %v192 = vld.sshfl [vmem:[#allocation1] sm:$0xff pattern:$0x75316420]
    %v193 = vld.sshfl [vmem:[#allocation1 + $0x8] sm:$0xff pattern:$0x75316420]
    %v194 = vsel %vm46, %v192, 0
    %v196 = vsel %vm46, %v193, 0
    %198 = vmatpush.msra.mxu0 0.0
    %199 = vmatpush.msra.mxu0 0.0
    %200 = vmatpush.msra.mxu0 0.0
    %201 = vmatpush.msra.mxu0 0.0
    %202 = vmatpush.msra.mxu0 0.0
    %203 = vmatpush.msra.mxu0 0.0
    %204 = vmatpush.msra.mxu0 0.0
    %205 = vmatpush.msra.mxu0 0.0
    %206 = vmatpush.msra.mxu0 0.0
    %207 = vmatpush.msra.mxu0 0.0
    %208 = vmatpush.msra.mxu0 0.0
    %209 = vmatpush.msra.mxu0 0.0
    %210 = vmatpush.msra.mxu0 0.0
    %211 = vmatpush.msra.mxu0 0.0
    %212 = vmatpush.msra.mxu0 0.0
    %213 = vmatpush.msra.mxu0 %v194
    %214 = vmatmul.f32.gmra.mxu0 %v44
    %v215 = vpop.f32.mrf.mxu0
    %v216 = vadd.f32 0.0, %v215
    %217 = vdwg.mxu0
    %218 = vmatpush.msra.mxu0 0.0
    %219 = vmatpush.msra.mxu0 0.0
    %220 = vmatpush.msra.mxu0 0.0
    %221 = vmatpush.msra.mxu0 0.0
    %222 = vmatpush.msra.mxu0 0.0
    %223 = vmatpush.msra.mxu0 0.0
    %224 = vmatpush.msra.mxu0 0.0
    %225 = vmatpush.msra.mxu0 0.0
    %226 = vmatpush.msra.mxu0 0.0
    %227 = vmatpush.msra.mxu0 0.0
    %228 = vmatpush.msra.mxu0 0.0
    %229 = vmatpush.msra.mxu0 0.0
    %230 = vmatpush.msra.mxu0 0.0
    %231 = vmatpush.msra.mxu0 0.0
    %232 = vmatpush.msra.mxu0 0.0
    %233 = vmatpush.msra.mxu0 %v196
    %234 = vmatmul.f32.gmra.mxu0 %v44
    %v235 = vpop.f32.mrf.mxu0
    %v236 = vadd.f32 0.0, %v235
    %237 = vdwg.mxu0
    %239 = vst [vmem:[#allocation1] ss:$2 sm:$0xff] %v187
    %v240 = vld.sshfl [vmem:[#allocation1] sm:$0xff pattern:$0x75316420]
    %v241 = vld.sshfl [vmem:[#allocation1 + $0x8] sm:$0xff pattern:$0x75316420]
    %v242 = vsel %vm46, %v240, 0
    %v244 = vsel %vm46, %v241, 0
    %246 = vmatpush.msra.mxu0 0.0
    %247 = vmatpush.msra.mxu0 0.0
    %248 = vmatpush.msra.mxu0 0.0
    %249 = vmatpush.msra.mxu0 0.0
    %250 = vmatpush.msra.mxu0 0.0
    %251 = vmatpush.msra.mxu0 0.0
    %252 = vmatpush.msra.mxu0 0.0
    %253 = vmatpush.msra.mxu0 0.0
    %254 = vmatpush.msra.mxu0 0.0
    %255 = vmatpush.msra.mxu0 0.0
    %256 = vmatpush.msra.mxu0 0.0
    %257 = vmatpush.msra.mxu0 0.0
    %258 = vmatpush.msra.mxu0 0.0
    %259 = vmatpush.msra.mxu0 0.0
    %260 = vmatpush.msra.mxu0 0.0
    %261 = vmatpush.msra.mxu0 %v242
    %262 = vmatmul.f32.gmra.mxu0 %v96
    %v263 = vpop.f32.mrf.mxu0
    %v264 = vadd.f32 %v216, %v263
    %265 = vdwg.mxu0
    %266 = vmatpush.msra.mxu0 0.0
    %267 = vmatpush.msra.mxu0 0.0
    %268 = vmatpush.msra.mxu0 0.0
    %269 = vmatpush.msra.mxu0 0.0
    %270 = vmatpush.msra.mxu0 0.0
    %271 = vmatpush.msra.mxu0 0.0
    %272 = vmatpush.msra.mxu0 0.0
    %273 = vmatpush.msra.mxu0 0.0
    %274 = vmatpush.msra.mxu0 0.0
    %275 = vmatpush.msra.mxu0 0.0
    %276 = vmatpush.msra.mxu0 0.0
    %277 = vmatpush.msra.mxu0 0.0
    %278 = vmatpush.msra.mxu0 0.0
    %279 = vmatpush.msra.mxu0 0.0
    %280 = vmatpush.msra.mxu0 0.0
    %281 = vmatpush.msra.mxu0 %v244
    %282 = vmatmul.f32.gmra.mxu0 %v96
    %v283 = vpop.f32.mrf.mxu0
    %v284 = vadd.f32 %v236, %v283
    %285 = vdwg.mxu0
    %v286 = vadd.f32 %v264, %v284
    %287 = vadd.xlane.f32.xlu0 %v286
    %v288 = vpop.xlane.xlu0 %287
    %v289 = vmul.f32 %v288, %v151
    %v290 = vsub.f32 %v264, %v289
    %v291 = vsub.f32 %v284, %v289
    %v292 = vmul.f32 %v290, %v290
    %v293 = vmul.f32 %v291, %v291
    %v294 = vadd.f32 %v292, %v293
    %295 = vadd.xlane.f32.xlu0 %v294
    %v296 = vpop.xlane.xlu0 %295
    %v297 = vmul.f32 %v296, %v151
    %v298 = vadd.f32 %v297, 1e-05
    %v299 = vrsqrt.pop %v298
    %v300 = vmul.f32 %v299, %v298
    %v301 = vmul.f32 %v300, %v299
    %v302 = vmul.f32 0.5, %v301
    %v303 = vsub.f32 1.5, %v302
    %v304 = vmul.f32 %v299, %v303
    %vm305 = vweird.f32 %v298
    %vm306 = vweird.f32 %v299
    %vm307 = vmor %vm305, %vm306
    %v308 = vsel %vm307, %v299, %v304
    %v309 = vsub.f32 0.0, %v289
    %v310 = vmul.f32 %v309, %v308
    %v311 = vmul.f32 %v264, %v308
    %v312 = vmul.f32 %v284, %v308
    %v313 = vadd.f32 %v311, %v310
    %v314 = vadd.f32 %v312, %v310
    %vm315 = vcmp.ge.f32.partialorder %v313, 0.0
    %vm316 = vcmp.ge.f32.partialorder %v314, 0.0
    %v317 = vmul.f32 %v313, 0.2
    %v318 = vmul.f32 %v314, 0.2
    %v319 = vsel %vm315, %v313, %v317
    %v320 = vsel %vm316, %v314, %v318
    %s321 = scalar_lea.vmem [#allocation5], 16
    %322 = vst [vmem:[%s321] sm:$0xff] %v319
    %323 = vst [vmem:[%s321 + $0x8] sm:$0xff] %v320
    // Predicated region
    $region22: #{tpu_custom_call.1} parent=1 // pred_check
      _
    $region23: #{tpu_custom_call.1} parent=1 // pred_check_branch
      %325 = sbr.rel (0) target = $region25
    $region24: #{tpu_custom_call.1} parent=1 // pred_region
      %327 = vsyncadd [#allocation4], 0
      %s328 = sshll.u32 [#allocation5], 4
      %s329 = int_to_ptr.vmem [resolvable:$true] %s328
      %s330 = sshll.u32 %s4, 4
      %s331 = int_to_ptr.hbm [resolvable:$true] %s330
      %336 = dma.vmem_to_hbm [thread:$0]  %s329, 512, %s331, [#allocation4], 256, 256, 16
    $region25: #{tpu_custom_call.1} parent=1 // pred_fallthru
      _
    // Predicated region
    $region26: #{tpu_custom_call.1} parent=1 // pred_check
      _
    $region27: #{tpu_custom_call.1} parent=1 // pred_check_branch
      %338 = sbr.rel (0) target = $region29
    $region28: #{tpu_custom_call.1} parent=1 // pred_region
      %340 = dma.done [#allocation4], 512
    $region29: #{tpu_custom_call.1} parent=1 // pred_fallthru
      _
    %341 = vsyncpa [#allocation3], 1
    %342 = vsyncpa [#allocation4], 1

</llo_original>
